<compile_context>
chip_gen: v5e
topology: v5e:2x2
jax: 0.10.0
libtpu: 0.0.40
codegen_flags: <defaults>
</compile_context>

<pallas_src>
import jax
import jax.numpy as jnp
from jax.experimental import pallas as pl
from jax.experimental.pallas import tpu as pltpu

_LANE = 128
_MIB = 1024 * 1024


def _round_up(n, m):
    return ((n + m - 1) // m) * m


def _vmem_capacity_bytes():
    """Physical per-TensorCore VMEM; conservative fallback if the query fails."""
    try:
        info = pltpu.get_tpu_info()
        cap = int(getattr(info, "vmem_capacity_bytes", 0) or 0)
        if cap > 0:
            return cap
    except Exception:
        pass
    return 64 * _MIB  # v7x per-core VMEM — the smallest current generation


def _pick_thid(d_hid_p, max_thid=512):
    """Largest multiple of 128 <= max_thid that divides the padded hidden dim."""
    best = _LANE
    t = _LANE
    lim = min(max_thid, d_hid_p)
    while t <= lim:
        if d_hid_p % t == 0:
            best = t
        t += _LANE
    return best


def _choose_tb(avail_bytes, per_row, b_sub, sub, two_cores, cap=1024):
    """Pick an MXU/vreg-aligned batch tile from the available VMEM budget."""
    tb = int(min(cap, max(avail_bytes, 0) // max(per_row, 1), b_sub))
    if tb >= 256:
        tb = (tb // 256) * 256            # 256-wide MXU granularity (v6e/v7x)
    elif tb >= 128:
        tb = 128
    else:
        tb = max(sub, (tb // sub) * sub)  # small batches: sublane multiple only
    # v7x has 2 TensorCores/chip: prefer >= 2 steps along the "parallel" batch
    # axis, but never shrink below a 256-aligned tile.  v5e/v6e are single-TC,
    # so splitting there is pure per-step overhead and is gated off.
    if two_cores and tb >= b_sub and b_sub >= 2 * 256:
        tb = max(256, ((b_sub // 2) // 256) * 256)
    return tb


# ---------------------------------------------------------------------------
# Kernels
# ---------------------------------------------------------------------------

def mlp_kernel(x_ref, w1_ref, b1_ref, w2_ref, b2_ref, o_ref):
    """Resident-weights path: both weight matrices live in VMEM."""
    # fc1: [tb, D_in] @ [D_in, D_hid] + [1, D_hid]   (f32 accumulate on MXU)
    h = jnp.dot(x_ref[...], w1_ref[...],
                preferred_element_type=jnp.float32) + b1_ref[...]
    if w2_ref.dtype == jnp.bfloat16:
        # Feed the second MXU pass its native bf16; accumulation stays f32.
        h = h.astype(jnp.bfloat16)
    # out: [tb, D_hid] @ [D_hid, D_out] + [1, D_out]
    y = jnp.dot(h, w2_ref[...], preferred_element_type=jnp.float32) + b2_ref[...]
    o_ref[...] = y.astype(o_ref.dtype)


def mlp_ktiled_kernel(x_ref, w1_ref, b1_ref, w2_ref, b2_ref, o_ref, acc_ref):
    """Hidden-dim streamed path: W1/W2 arrive as K-slabs, f32 accumulator in VMEM."""
    k = pl.program_id(1)

    @pl.when(k == 0)
    def _():
        acc_ref[...] = jnp.zeros_like(acc_ref)

    # Partial hidden slab: h_k = x @ W1[:, k-slab] + b1[k-slab]
    h = jnp.dot(x_ref[...], w1_ref[...],
                preferred_element_type=jnp.float32) + b1_ref[...]
    if w2_ref.dtype == jnp.bfloat16:
        h = h.astype(jnp.bfloat16)
    acc_ref[...] += jnp.dot(h, w2_ref[...], preferred_element_type=jnp.float32)

    @pl.when(k == pl.num_programs(1) - 1)
    def _():
        o_ref[...] = (acc_ref[...] + b2_ref[...]).astype(o_ref.dtype)


# ---------------------------------------------------------------------------
# Wrappers
# ---------------------------------------------------------------------------

def pad_mlp_params(w1, b1, w2, b2):
    """Zero-pad weights/biases to 128-lane multiples ONCE (hoisted out of the
    per-call path so repeated forward calls do not re-materialize padded copies
    in HBM). Returns (padded_params, (D_in, D_hid, D_out))."""
    D_in, D_hid = w1.shape
    D_out = w2.shape[1]
    D_in_p = _round_up(D_in, _LANE)
    D_hid_p = _round_up(D_hid, _LANE)
    D_out_p = _round_up(D_out, _LANE)
    w1p = jnp.pad(w1, ((0, D_in_p - D_in), (0, D_hid_p - D_hid)))
    b1p = jnp.pad(b1.reshape(1, D_hid), ((0, 0), (0, D_hid_p - D_hid)))
    w2p = jnp.pad(w2, ((0, D_hid_p - D_hid), (0, D_out_p - D_out)))
    b2p = jnp.pad(b2.reshape(1, D_out), ((0, 0), (0, D_out_p - D_out)))
    return (w1p, b1p, w2p, b2p), (D_in, D_hid, D_out)


def mlp_forward_padded(x, padded_params, dims, *, tb=None, thid=None,
                       force_ktiled=False):
    """x: [B, D_in]; padded_params from pad_mlp_params (lane-padded, [in,out])."""
    w1p, b1p, w2p, b2p = padded_params
    D_in, D_hid, D_out = dims
    B, d_in_x = x.shape
    assert d_in_x == D_in, (d_in_x, D_in)

    D_in_p, D_hid_p = w1p.shape
    D_out_p = w2p.shape[1]

    dtype = x.dtype
    itemsize = jnp.dtype(dtype).itemsize
    w_item = jnp.dtype(w1p.dtype).itemsize
    sub = 16 if dtype == jnp.bfloat16 else 8
    h_bf16 = (w2p.dtype == jnp.bfloat16)

    # ---- per-generation VMEM budget --------------------------------------
    vmem_cap = _vmem_capacity_bytes()
    budget = int(vmem_cap * 0.8)           # ~51 MiB on v7x, ~102 MiB on v5e/v6e
    headroom = 4 * _MIB                    # compiler-internal scratch headroom
    two_cores = vmem_cap <= 64 * _MIB      # v7x proxy: 64 MiB/TC, 2 TCs/chip

    B_sub = _round_up(B, sub)

    # Resident weights conservatively accounted double-buffered (2x).
    weight_bytes = 2 * (D_in_p * D_hid_p + D_hid_p
                        + D_hid_p * D_out_p + D_out_p) * w_item
    per_row_res = (2 * (D_in_p + D_out_p) * itemsize     # pipelined x / out tiles
                   + D_hid_p * 4 + D_out_p * 4            # f32 h, f32 y
                   + (D_hid_p * 2 if h_bf16 else 0))      # bf16 copy of h

    min_rows = min(128, B_sub)
    use_resident = (not force_ktiled) and (
        weight_bytes + min_rows * per_row_res + headroom <= budget)

    flops_per_row = 2 * (D_in_p * D_hid_p + D_hid_p * D_out_p)

    if use_resident:
        if tb is None:
            tb = _choose_tb(budget - weight_bytes - headroom, per_row_res,
                            B_sub, sub, two_cores, cap=1024)
        B_pad = _round_up(B, tb)
        xp = jnp.pad(x, ((0, B_pad - B), (0, D_in_p - D_in)))

        vmem_need = weight_bytes + tb * per_row_res + headroom
        vmem_limit = int(min(vmem_cap, max(vmem_need, 32 * _MIB)))
        cost = pl.CostEstimate(
            flops=int(B_pad * flops_per_row),
            transcendentals=0,
            bytes_accessed=int(B_pad * (D_in_p + D_out_p) * itemsize
                               + weight_bytes // 2))

        out = pl.pallas_call(
            mlp_kernel,
            out_shape=jax.ShapeDtypeStruct((B_pad, D_out_p), dtype),
            grid_spec=pltpu.PrefetchScalarGridSpec(
                num_scalar_prefetch=0,
                grid=(B_pad // tb,),
                in_specs=[
                    pl.BlockSpec((tb, D_in_p), lambda i: (i, 0)),        # x tile
                    pl.BlockSpec((D_in_p, D_hid_p), lambda i: (0, 0)),   # W1 resident
                    pl.BlockSpec((1, D_hid_p), lambda i: (0, 0)),        # b1 resident
                    pl.BlockSpec((D_hid_p, D_out_p), lambda i: (0, 0)),  # W2 resident
                    pl.BlockSpec((1, D_out_p), lambda i: (0, 0)),        # b2 resident
                ],
                out_specs=pl.BlockSpec((tb, D_out_p), lambda i: (i, 0)),
            ),
            compiler_params=pltpu.CompilerParams(
                # TODO(synk): benchmark pltpu.CORE_PARALLEL on the batch axis for v7x.
                dimension_semantics=("parallel",),
                vmem_limit_bytes=vmem_limit,
            ),
            cost_estimate=cost,
        )(xp, w1p, b1p, w2p, b2p)
    else:
        # ---- K-tiled path: stream W1/W2 in hidden-dim slabs ---------------
        if thid is None:
            thid = _pick_thid(D_hid_p)
        assert thid % _LANE == 0 and D_hid_p % thid == 0, (thid, D_hid_p)

        fixed = 2 * (D_in_p * thid + thid + thid * D_out_p + D_out_p) * w_item
        per_row_k = (2 * (D_in_p + D_out_p) * itemsize    # pipelined x / out
                     + D_out_p * 4                         # f32 accumulator
                     + thid * 4 + D_out_p * 4              # f32 h slab, partial y
                     + (thid * 2 if h_bf16 else 0))        # bf16 copy of h slab
        if tb is None:
            tb = _choose_tb(budget - fixed - headroom, per_row_k,
                            B_sub, sub, two_cores, cap=512)
        B_pad = _round_up(B, tb)
        xp = jnp.pad(x, ((0, B_pad - B), (0, D_in_p - D_in)))

        vmem_need = fixed + tb * per_row_k + headroom
        vmem_limit = int(min(vmem_cap, max(vmem_need, 32 * _MIB)))
        cost = pl.CostEstimate(
            flops=int(B_pad * flops_per_row),
            transcendentals=0,
            bytes_accessed=int(B_pad * (D_in_p + D_out_p) * itemsize
                               + (weight_bytes // 2) * (B_pad // tb)))

        out = pl.pallas_call(
            mlp_ktiled_kernel,
            out_shape=jax.ShapeDtypeStruct((B_pad, D_out_p), dtype),
            grid_spec=pltpu.PrefetchScalarGridSpec(
                num_scalar_prefetch=0,
                grid=(B_pad // tb, D_hid_p // thid),
                in_specs=[
                    pl.BlockSpec((tb, D_in_p), lambda i, k: (i, 0)),      # x tile
                    pl.BlockSpec((D_in_p, thid), lambda i, k: (0, k)),    # W1 slab
                    pl.BlockSpec((1, thid), lambda i, k: (0, k)),         # b1 slab
                    pl.BlockSpec((thid, D_out_p), lambda i, k: (k, 0)),   # W2 slab
                    pl.BlockSpec((1, D_out_p), lambda i, k: (0, 0)),      # b2
                ],
                out_specs=pl.BlockSpec((tb, D_out_p), lambda i, k: (i, 0)),
                scratch_shapes=[pltpu.VMEM((tb, D_out_p), jnp.float32)],
            ),
            compiler_params=pltpu.CompilerParams(
                dimension_semantics=("parallel", "arbitrary"),
                vmem_limit_bytes=vmem_limit,
            ),
            cost_estimate=cost,
        )(xp, w1p, b1p, w2p, b2p)

    # Strip batch / feature padding.
    return out[:B, :D_out]


def mlp_forward(x, w1, b1, w2, b2, **kwargs):
    """One-off convenience wrapper (pads parameters on the fly).
    For repeated calls, pad once with pad_mlp_params + mlp_forward_padded."""
    padded, dims = pad_mlp_params(w1, b1, w2, b2)
    return mlp_forward_padded(x, padded, dims, **kwargs)


def init_mlp_params(key, input_dim, hidden_dim, output_dim, dtype=jnp.float32):
    """Deterministic init mimicking nn.Linear's uniform(-1/sqrt(fan_in), +)."""
    k1, k2, k3, k4 = jax.random.split(key, 4)
    bound1 = 1.0 / (input_dim ** 0.5)
    bound2 = 1.0 / (hidden_dim ** 0.5)
    # stored transposed relative to PyTorch: [in, out]
    w1 = jax.random.uniform(k1, (input_dim, hidden_dim), dtype,
                            minval=-bound1, maxval=bound1)
    b1 = jax.random.uniform(k2, (hidden_dim,), dtype,
                            minval=-bound1, maxval=bound1)
    w2 = jax.random.uniform(k3, (hidden_dim, output_dim), dtype,
                            minval=-bound2, maxval=bound2)
    b2 = jax.random.uniform(k4, (output_dim,), dtype,
                            minval=-bound2, maxval=bound2)
    return w1, b1, w2, b2


if __name__ == "__main__":
    key = jax.random.PRNGKey(0)
    kx, kp, kx2, kx3 = jax.random.split(key, 4)

    # Small shapes consistent with the module: x: [batch, input_dim]
    batch, input_dim, hidden_dim, output_dim = 8, 16, 32, 8
    x = jax.random.normal(kx, (batch, input_dim), jnp.float32)
    w1, b1, w2, b2 = init_mlp_params(kp, input_dim, hidden_dim, output_dim)

    # Hoisted padding: pad parameters once, reuse across forward calls.
    padded, dims = pad_mlp_params(w1, b1, w2, b2)

    y = jax.block_until_ready(mlp_forward_padded(x, padded, dims))
    y_ref = (x @ w1 + b1[None, :]) @ w2 + b2[None, :]
    assert y.shape == (batch, output_dim)
    assert jnp.allclose(y, y_ref, atol=1e-5, rtol=1e-5)

    # Non-multiple batch (tail handling) reusing the same pre-padded params.
    batch2 = 20
    x2 = jax.random.normal(kx2, (batch2, input_dim), jnp.float32)
    y2 = jax.block_until_ready(mlp_forward_padded(x2, padded, dims))
    y2_ref = (x2 @ w1 + b1[None, :]) @ w2 + b2[None, :]
    assert y2.shape == (batch2, output_dim)
    assert jnp.allclose(y2, y2_ref, atol=1e-5, rtol=1e-5)

    # Exercise the K-tiled (hidden-dim streamed) fallback with >= 2 K steps.
    hidden_dim3 = 256
    w1c, b1c, w2c, b2c = init_mlp_params(kp, input_dim, hidden_dim3, output_dim)
    x3 = jax.random.normal(kx3, (batch, input_dim), jnp.float32)
    y3 = jax.block_until_ready(
        mlp_forward(x3, w1c, b1c, w2c, b2c, force_ktiled=True, thid=128))
    y3_ref = (x3 @ w1c + b1c[None, :]) @ w2c + b2c[None, :]
    assert y3.shape == (batch, output_dim)
    assert jnp.allclose(y3, y3_ref, atol=1e-4, rtol=1e-4)

    print("KERNEL_OK")
</pallas_src>

<mosaic_0001>
module attributes {stable_mosaic.version = 11 : i64} {
  func.func @mlp_kernel(%arg0: i32, %arg1: memref<8x128xf32, #tpu.memory_space<vmem>>, %arg2: memref<128x128xf32, #tpu.memory_space<vmem>>, %arg3: memref<1x128xf32, #tpu.memory_space<vmem>>, %arg4: memref<128x128xf32, #tpu.memory_space<vmem>>, %arg5: memref<1x128xf32, #tpu.memory_space<vmem>>, %arg6: memref<8x128xf32, #tpu.memory_space<vmem>>) attributes {dimension_semantics = [#tpu.dimension_semantics<parallel>], iteration_bounds = array<i64: 1>, scalar_prefetch = 0 : i64, scratch_operands = 0 : i64, tpu.core_type = #tpu.core_type<tc>, window_params = [{transform_indices = @transform_0, window_bounds = array<i64: 8, 128>}, {pipeline_mode = #tpu.pipeline_mode<synchronous>, transform_indices = @transform_1, window_bounds = array<i64: 128, 128>}, {pipeline_mode = #tpu.pipeline_mode<synchronous>, transform_indices = @transform_2, window_bounds = array<i64: 1, 128>}, {pipeline_mode = #tpu.pipeline_mode<synchronous>, transform_indices = @transform_3, window_bounds = array<i64: 128, 128>}, {pipeline_mode = #tpu.pipeline_mode<synchronous>, transform_indices = @transform_4, window_bounds = array<i64: 1, 128>}, {transform_indices = @transform_5, window_bounds = array<i64: 8, 128>}]} {
    %c0 = arith.constant 0 : index
    %c0_0 = arith.constant 0 : index
    %0 = vector.load %arg1[%c0, %c0_0] : memref<8x128xf32, #tpu.memory_space<vmem>>, vector<8x128xf32>
    %c0_1 = arith.constant 0 : index
    %c0_2 = arith.constant 0 : index
    %1 = vector.load %arg2[%c0_1, %c0_2] : memref<128x128xf32, #tpu.memory_space<vmem>>, vector<128x128xf32>
    %cst = arith.constant dense<0.000000e+00> : vector<8x128xf32>
    %2 = tpu.matmul %0, %1, %cst {dimension_numbers = #tpu.dot_dimension_numbers<[1], [0], [0], [1], [0, 0, 1, 1], [], []>} : vector<8x128xf32>, vector<128x128xf32>, vector<8x128xf32> -> vector<8x128xf32>
    %c0_3 = arith.constant 0 : index
    %c0_4 = arith.constant 0 : index
    %3 = vector.load %arg3[%c0_3, %c0_4] : memref<1x128xf32, #tpu.memory_space<vmem>>, vector<1x128xf32>
    %4 = vector.broadcast %3 : vector<1x128xf32> to vector<8x128xf32>
    %5 = arith.addf %2, %4 : vector<8x128xf32>
    %c0_5 = arith.constant 0 : index
    %c0_6 = arith.constant 0 : index
    %6 = vector.load %arg4[%c0_5, %c0_6] : memref<128x128xf32, #tpu.memory_space<vmem>>, vector<128x128xf32>
    %cst_7 = arith.constant dense<0.000000e+00> : vector<8x128xf32>
    %7 = tpu.matmul %5, %6, %cst_7 {dimension_numbers = #tpu.dot_dimension_numbers<[1], [0], [0], [1], [0, 0, 1, 1], [], []>} : vector<8x128xf32>, vector<128x128xf32>, vector<8x128xf32> -> vector<8x128xf32>
    %c0_8 = arith.constant 0 : index
    %c0_9 = arith.constant 0 : index
    %8 = vector.load %arg5[%c0_8, %c0_9] : memref<1x128xf32, #tpu.memory_space<vmem>>, vector<1x128xf32>
    %9 = vector.broadcast %8 : vector<1x128xf32> to vector<8x128xf32>
    %10 = arith.addf %7, %9 : vector<8x128xf32>
    %c0_10 = arith.constant 0 : index
    %c0_11 = arith.constant 0 : index
    %11 = vector.load %arg6[%c0_10, %c0_11] : memref<8x128xf32, #tpu.memory_space<vmem>>, vector<8x128xf32>
    tpu.vector_store %arg6[%c0_10, %c0_11], %10 {strides = array<i32>} : memref<8x128xf32, #tpu.memory_space<vmem>>, vector<8x128xf32>,
    return
  }
  func.func @transform_0(%arg0: i32) -> (i32, i32) {
    %c0_i32 = arith.constant 0 : i32
    %c0_i32_0 = arith.constant 0 : i32
    return %arg0, %c0_i32 : i32, i32
  }
  func.func @transform_1(%arg0: i32) -> (i32, i32) {
    %c0_i32 = arith.constant 0 : i32
    %c0_i32_0 = arith.constant 0 : i32
    %c0_i32_1 = arith.constant 0 : i32
    return %c0_i32, %c0_i32_0 : i32, i32
  }
  func.func @transform_2(%arg0: i32) -> (i32, i32) {
    %c0_i32 = arith.constant 0 : i32
    %c0_i32_0 = arith.constant 0 : i32
    %c0_i32_1 = arith.constant 0 : i32
    return %c0_i32, %c0_i32_0 : i32, i32
  }
  func.func @transform_3(%arg0: i32) -> (i32, i32) {
    %c0_i32 = arith.constant 0 : i32
    %c0_i32_0 = arith.constant 0 : i32
    %c0_i32_1 = arith.constant 0 : i32
    return %c0_i32, %c0_i32_0 : i32, i32
  }
  func.func @transform_4(%arg0: i32) -> (i32, i32) {
    %c0_i32 = arith.constant 0 : i32
    %c0_i32_0 = arith.constant 0 : i32
    %c0_i32_1 = arith.constant 0 : i32
    return %c0_i32, %c0_i32_0 : i32, i32
  }
  func.func @transform_5(%arg0: i32) -> (i32, i32) {
    %c0_i32 = arith.constant 0 : i32
    %c0_i32_0 = arith.constant 0 : i32
    return %arg0, %c0_i32 : i32, i32
  }
}

</mosaic_0001>

<llo_original>
// kernel: tpu_custom_call.1
$region0: #{tpu_custom_call.1}
  #allocation0 [shape = 'u32[]', space=smem, size = 0x4, offset = 0x4, fixed_abs, tag = 'smem constant byte address 0x4 - core index']
  #allocation1 [shape = 'u32[72,128]{1,0:T(1,128)}', space=vmem, size = 0x9000, scoped, tag = 'internal scratch']
  %s0 = inlined_call_operand.hbm [shape: f32[8,128], index: 0, kind: input, shape index: {}]
  %s1 = inlined_call_operand.hbm [shape: f32[128,128], index: 1, kind: input, shape index: {}]
  %s2 = inlined_call_operand.vmem [shape: f32[1,128], index: 2, kind: input, shape index: {}]
  %s3 = inlined_call_operand.hbm [shape: f32[128,128], index: 3, kind: input, shape index: {}]
  %s4 = inlined_call_operand.vmem [shape: f32[1,128], index: 4, kind: input, shape index: {}]
  %s5 = inlined_call_operand.hbm [shape: f32[8,128], index: 5, kind: output, shape index: {}]
  %s6 = sld [smem:[#allocation0]]
  $region42: #{tpu_custom_call.1} parent=0
    _
  %s8 = ssub.s32 1, %s6
  %s9 = scalar_select 0, %s8, %s6
  $region1: #{tpu_custom_call.1} parent=0
    #allocation2 [shape = 'u8[4096]{0}', space=vmem, size = 0x1000, scoped, tag = 'input window, operand 0, single buffered']
    #allocation3 [shape = 's32[1]{0}', space=sflag, size = 0x4, scoped, tag = 'scoped memory for tpu_custom_call.1']
    #allocation4 [shape = 's32[1]{0}', space=sflag, size = 0x4, scoped, tag = 'scoped memory for tpu_custom_call.1']
    #allocation5 [shape = 'u8[65536]{0}', space=vmem, size = 0x10000, scoped, tag = 'input window, operand 1, single buffered']
    #allocation6 [shape = 's32[1]{0}', space=sflag, size = 0x4, scoped, tag = 'scoped memory for tpu_custom_call.1']
    #allocation7 [shape = 'u8[65536]{0}', space=vmem, size = 0x10000, scoped, tag = 'input window, operand 3, single buffered']
    #allocation8 [shape = 'u8[4096]{0}', space=vmem, size = 0x1000, scoped, tag = 'output window, operand 0, single buffered']
    %10 = vsyncpa [#allocation3], 0
    %11 = vsyncpa [#allocation6], 0
    %12 = vsyncpa [#allocation4], 0
    // Predicated region
    $region2: #{tpu_custom_call.1} parent=1 // pred_check
      _
    $region3: #{tpu_custom_call.1} parent=1 // pred_check_branch
      %14 = sbr.rel (0) target = $region5
    $region4: #{tpu_custom_call.1} parent=1 // pred_region
      %16 = vsyncadd [#allocation3], 0
      %s18 = sshll.u32 %s0, 4
      %s19 = int_to_ptr.hbm [resolvable:$true] %s18
      %s20 = sshll.u32 [#allocation2], 4
      %s21 = int_to_ptr.vmem [resolvable:$true] %s20
      %23 = dma.hbm_to_vmem [thread:$0]  %s19, 128, %s21, [#allocation3]
    $region5: #{tpu_custom_call.1} parent=1 // pred_fallthru
      _
    // Predicated region
    $region6: #{tpu_custom_call.1} parent=1 // pred_check
      _
    $region7: #{tpu_custom_call.1} parent=1 // pred_check_branch
      %25 = sbr.rel (0) target = $region9
    $region8: #{tpu_custom_call.1} parent=1 // pred_region
      %27 = vsyncadd [#allocation6], 0
      %s28 = sshll.u32 %s1, 4
      %s29 = int_to_ptr.hbm [resolvable:$true] %s28
      %s30 = sshll.u32 [#allocation5], 4
      %s31 = int_to_ptr.vmem [resolvable:$true] %s30
      %36 = dma.hbm_to_vmem [thread:$0]  %s29, 2048, %s31, [#allocation6], 128, 128, 8
    $region9: #{tpu_custom_call.1} parent=1 // pred_fallthru
      _
    // Predicated region
    $region10: #{tpu_custom_call.1} parent=1 // pred_check
      _
    $region11: #{tpu_custom_call.1} parent=1 // pred_check_branch
      %38 = sbr.rel (0) target = $region13
    $region12: #{tpu_custom_call.1} parent=1 // pred_region
      _
    $region13: #{tpu_custom_call.1} parent=1 // pred_fallthru
      _
    // Predicated region
    $region14: #{tpu_custom_call.1} parent=1 // pred_check
      _
    $region15: #{tpu_custom_call.1} parent=1 // pred_check_branch
      %40 = sbr.rel (0) target = $region17
    $region16: #{tpu_custom_call.1} parent=1 // pred_region
      %42 = vsyncadd [#allocation6], 0
      %s43 = sshll.u32 %s3, 4
      %s44 = int_to_ptr.hbm [resolvable:$true] %s43
      %s45 = sshll.u32 [#allocation7], 4
      %s46 = int_to_ptr.vmem [resolvable:$true] %s45
      %51 = dma.hbm_to_vmem [thread:$0]  %s44, 2048, %s46, [#allocation6], 128, 128, 8
    $region17: #{tpu_custom_call.1} parent=1 // pred_fallthru
      _
    // Predicated region
    $region18: #{tpu_custom_call.1} parent=1 // pred_check
      _
    $region19: #{tpu_custom_call.1} parent=1 // pred_check_branch
      %53 = sbr.rel (0) target = $region21
    $region20: #{tpu_custom_call.1} parent=1 // pred_region
      _
    $region21: #{tpu_custom_call.1} parent=1 // pred_fallthru
      _
    // Predicated region
    $region22: #{tpu_custom_call.1} parent=1 // pred_check
      _
    $region23: #{tpu_custom_call.1} parent=1 // pred_check_branch
      %55 = sbr.rel (0) target = $region25
    $region24: #{tpu_custom_call.1} parent=1 // pred_region
      %57 = dma.done [#allocation3], 128
    $region25: #{tpu_custom_call.1} parent=1 // pred_fallthru
      _
    // Predicated region
    $region26: #{tpu_custom_call.1} parent=1 // pred_check
      _
    $region27: #{tpu_custom_call.1} parent=1 // pred_check_branch
      %59 = sbr.rel (0) target = $region29
    $region28: #{tpu_custom_call.1} parent=1 // pred_region
      %61 = dma.done [#allocation6], 2048
    $region29: #{tpu_custom_call.1} parent=1 // pred_fallthru
      _
    // Predicated region
    $region30: #{tpu_custom_call.1} parent=1 // pred_check
      _
    $region31: #{tpu_custom_call.1} parent=1 // pred_check_branch
      %63 = sbr.rel (0) target = $region33
    $region32: #{tpu_custom_call.1} parent=1 // pred_region
      %65 = dma.done [#allocation6], 2048
    $region33: #{tpu_custom_call.1} parent=1 // pred_fallthru
      _
    %v66 = vld [vmem:[#allocation2] sm:$0xff]
    %v67 = vld [vmem:[#allocation5] sm:$0xff]
    %v68 = vld [vmem:[#allocation5 + $0x8] sm:$0xff]
    %v69 = vld [vmem:[#allocation5 + $0x10] sm:$0xff]
    %v70 = vld [vmem:[#allocation5 + $0x18] sm:$0xff]
    %v71 = vld [vmem:[#allocation5 + $0x20] sm:$0xff]
    %v72 = vld [vmem:[#allocation5 + $0x28] sm:$0xff]
    %v73 = vld [vmem:[#allocation5 + $0x30] sm:$0xff]
    %v74 = vld [vmem:[#allocation5 + $0x38] sm:$0xff]
    %v75 = vld [vmem:[#allocation5 + $0x40] sm:$0xff]
    %v76 = vld [vmem:[#allocation5 + $0x48] sm:$0xff]
    %v77 = vld [vmem:[#allocation5 + $0x50] sm:$0xff]
    %v78 = vld [vmem:[#allocation5 + $0x58] sm:$0xff]
    %v79 = vld [vmem:[#allocation5 + $0x60] sm:$0xff]
    %v80 = vld [vmem:[#allocation5 + $0x68] sm:$0xff]
    %v81 = vld [vmem:[#allocation5 + $0x70] sm:$0xff]
    %v82 = vld [vmem:[#allocation5 + $0x78] sm:$0xff]
    %v83 = vld [vmem:[%s2] sm:$0x1]
    %v85 = vperm.slane %v83, 0
    %87 = vmatpush.msra.mxu0 %v82
    %88 = vmatpush.msra.mxu0 %v81
    %89 = vmatpush.msra.mxu0 %v80
    %90 = vmatpush.msra.mxu0 %v79
    %91 = vmatpush.msra.mxu0 %v78
    %92 = vmatpush.msra.mxu0 %v77
    %93 = vmatpush.msra.mxu0 %v76
    %94 = vmatpush.msra.mxu0 %v75
    %95 = vmatpush.msra.mxu0 %v74
    %96 = vmatpush.msra.mxu0 %v73
    %97 = vmatpush.msra.mxu0 %v72
    %98 = vmatpush.msra.mxu0 %v71
    %99 = vmatpush.msra.mxu0 %v70
    %100 = vmatpush.msra.mxu0 %v69
    %101 = vmatpush.msra.mxu0 %v68
    %102 = vmatpush.msra.mxu0 %v67
    %103 = vmatmul.f32.gmra.mxu0 %v66
    %v104 = vpop.f32.mrf.mxu0
    %v105 = vadd.f32 %v85, %v104
    %106 = vdwg.mxu0
    %v107 = vld [vmem:[#allocation7] sm:$0xff]
    %v108 = vld [vmem:[#allocation7 + $0x8] sm:$0xff]
    %v109 = vld [vmem:[#allocation7 + $0x10] sm:$0xff]
    %v110 = vld [vmem:[#allocation7 + $0x18] sm:$0xff]
    %v111 = vld [vmem:[#allocation7 + $0x20] sm:$0xff]
    %v112 = vld [vmem:[#allocation7 + $0x28] sm:$0xff]
    %v113 = vld [vmem:[#allocation7 + $0x30] sm:$0xff]
    %v114 = vld [vmem:[#allocation7 + $0x38] sm:$0xff]
    %v115 = vld [vmem:[#allocation7 + $0x40] sm:$0xff]
    %v116 = vld [vmem:[#allocation7 + $0x48] sm:$0xff]
    %v117 = vld [vmem:[#allocation7 + $0x50] sm:$0xff]
    %v118 = vld [vmem:[#allocation7 + $0x58] sm:$0xff]
    %v119 = vld [vmem:[#allocation7 + $0x60] sm:$0xff]
    %v120 = vld [vmem:[#allocation7 + $0x68] sm:$0xff]
    %v121 = vld [vmem:[#allocation7 + $0x70] sm:$0xff]
    %v122 = vld [vmem:[#allocation7 + $0x78] sm:$0xff]
    %v123 = vld [vmem:[%s4] sm:$0x1]
    %v125 = vperm.slane %v123, 0
    %127 = vmatpush.msra.mxu0 %v122
    %128 = vmatpush.msra.mxu0 %v121
    %129 = vmatpush.msra.mxu0 %v120
    %130 = vmatpush.msra.mxu0 %v119
    %131 = vmatpush.msra.mxu0 %v118
    %132 = vmatpush.msra.mxu0 %v117
    %133 = vmatpush.msra.mxu0 %v116
    %134 = vmatpush.msra.mxu0 %v115
    %135 = vmatpush.msra.mxu0 %v114
    %136 = vmatpush.msra.mxu0 %v113
    %137 = vmatpush.msra.mxu0 %v112
    %138 = vmatpush.msra.mxu0 %v111
    %139 = vmatpush.msra.mxu0 %v110
    %140 = vmatpush.msra.mxu0 %v109
    %141 = vmatpush.msra.mxu0 %v108
    %142 = vmatpush.msra.mxu0 %v107
    %143 = vmatmul.f32.gmra.mxu0 %v105
    %v144 = vpop.f32.mrf.mxu0
    %v145 = vadd.f32 %v125, %v144
    %146 = vdwg.mxu0
    %147 = vst [vmem:[#allocation8] sm:$0xff] %v145
    // Predicated region
    $region34: #{tpu_custom_call.1} parent=1 // pred_check
      _
    $region35: #{tpu_custom_call.1} parent=1 // pred_check_branch
      %149 = sbr.rel (0) target = $region37
    $region36: #{tpu_custom_call.1} parent=1 // pred_region
      %151 = vsyncadd [#allocation4], 0
      %s153 = sshll.u32 [#allocation8], 4
      %s154 = int_to_ptr.vmem [resolvable:$true] %s153
      %s155 = sshll.u32 %s5, 4
      %s156 = int_to_ptr.hbm [resolvable:$true] %s155
      %158 = dma.vmem_to_hbm [thread:$0]  %s154, 128, %s156, [#allocation4]
    $region37: #{tpu_custom_call.1} parent=1 // pred_fallthru
      _
    // Predicated region
    $region38: #{tpu_custom_call.1} parent=1 // pred_check
      _
    $region39: #{tpu_custom_call.1} parent=1 // pred_check_branch
      %160 = sbr.rel (0) target = $region41
    $region40: #{tpu_custom_call.1} parent=1 // pred_region
      %162 = dma.done [#allocation4], 128
    $region41: #{tpu_custom_call.1} parent=1 // pred_fallthru
      _
    %163 = vsyncpa [#allocation3], 1
    %164 = vsyncpa [#allocation6], 1
    %165 = vsyncpa [#allocation4], 1

</llo_original>
